<compile_context>
chip_gen: v5e
topology: v5e:2x2
jax: 0.10.0
libtpu: 0.0.40
codegen_flags: <defaults>
</compile_context>

<pallas_src>
import jax
import jax.numpy as jnp
from jax import lax
from jax.experimental import pallas as pl
from jax.experimental.pallas import tpu as pltpu

C_IN = 32
C_OUT = 64
PACK = 4                       # original rows packed per lane-dense row
C_PK_IN = C_IN * PACK          # 128 (full-lane input rows)
C_PK_OUT = C_OUT * PACK        # 256 (lane-dense output rows)
BN_EPS = 1e-5
TMH_MAX = 8192                 # packed rows per tile (= 32768 original rows)
NCORES = 2                     # megacore split for the stats pass
VMEM_LIMIT = 32 * 1024 * 1024


def _round_up(x, m):
    return ((x + m - 1) // m) * m


def mlp1b_forward(x_nlc, w, b, gamma, beta, out_dtype=jnp.float32):
    """x_nlc: (N, L, 32).  Returns (N, L, 64).

    `b` (Linear bias) is accepted for interface parity but is mathematically
    cancelled by the training-mode BatchNorm mean subtraction.
    """
    del b
    N, L, C = x_nlc.shape
    assert C == C_IN
    M = N * L

    # ---- packing (pad only if M is not a multiple of PACK*8) --------------
    x2d = x_nlc.reshape(M, C_IN).astype(jnp.float32)
    Mpad = _round_up(M, PACK * 8)
    if Mpad != M:
        x2d = jnp.pad(x2d, ((0, Mpad - M), (0, 0)))   # zero rows: stat-neutral
    Mh = Mpad // PACK                                 # packed rows, multiple of 8
    xp = x2d.reshape(Mh, C_PK_IN)

    num_tiles = pl.cdiv(Mh, TMH_MAX)
    TMH = _round_up(pl.cdiv(Mh, num_tiles), 8)        # <= Mh, <= TMH_MAX
    tiles_per_core = pl.cdiv(num_tiles, NCORES)

    # ---- pass 1: Gram-matrix batch statistics (MXU + DMA only) ------------
    def stats_kernel(x_ref, g_ref, s_ref):
        c = pl.program_id(0)
        i = pl.program_id(1)

        @pl.when(i == 0)
        def _init():
            g_ref[...] = jnp.zeros(g_ref.shape, g_ref.dtype)
            s_ref[...] = jnp.zeros(s_ref.shape, s_ref.dtype)

        gidx = c * tiles_per_core + i          # global tile index (may be phantom)
        rows_valid = Mh - gidx * TMH           # <= 0 for phantom tiles
        x = x_ref[...]

        def accum(xv):
            g_ref[...] += lax.dot_general(
                xv, xv, (((0,), (0,)), ((), ())),
                preferred_element_type=jnp.float32)
            s_ref[...] += jnp.sum(xv, axis=0, keepdims=True)

        @pl.when(rows_valid >= TMH)            # full tile: no masking cost
        def _full():
            accum(x)

        @pl.when(rows_valid < TMH)             # ragged / phantom tile: mask tail
        def _ragged():
            rid = lax.broadcasted_iota(jnp.int32, (TMH, C_PK_IN), 0)
            accum(jnp.where(rid < rows_valid, x, 0.0))

    def x_stats_map(c, i):
        # Clamp phantom tiles (core 1 when num_tiles is odd) to a real block.
        g = jnp.minimum(c * tiles_per_core + i, num_tiles - 1)
        return (g, 0)

    g_parts, s_parts = pl.pallas_call(
        stats_kernel,
        grid=(NCORES, tiles_per_core),
        in_specs=[pl.BlockSpec((TMH, C_PK_IN), x_stats_map)],
        out_specs=(
            pl.BlockSpec((None, C_PK_IN, C_PK_IN), lambda c, i: (c, 0, 0)),
            pl.BlockSpec((None, 1, C_PK_IN), lambda c, i: (c, 0, 0)),
        ),
        out_shape=(
            jax.ShapeDtypeStruct((NCORES, C_PK_IN, C_PK_IN), jnp.float32),
            jax.ShapeDtypeStruct((NCORES, 1, C_PK_IN), jnp.float32),
        ),
        compiler_params=pltpu.CompilerParams(
            dimension_semantics=("parallel", "arbitrary"),
            vmem_limit_bytes=VMEM_LIMIT),
    )(xp)

    # ---- tiny XLA glue: stats -> fused (scaled weight, shift) -------------
    w_t = w.T.astype(jnp.float32)                          # (32, 64)
    G = jnp.sum(g_parts, axis=0)                           # (128, 128)
    s = jnp.sum(s_parts, axis=(0, 1))                      # (128,)
    sx = jnp.sum(s.reshape(PACK, C_IN), axis=0)            # (32,)  = sum_i x_i
    G32 = sum(G[k * C_IN:(k + 1) * C_IN, k * C_IN:(k + 1) * C_IN]
              for k in range(PACK))                        # (32,32) = X^T X
    sum64 = jnp.dot(sx, w_t, precision="highest")          # sum_i y_i
    sq64 = jnp.sum(w_t * jnp.dot(G32, w_t, precision="highest"), axis=0)  # sum y^2
    m = jnp.float32(M)
    mean = sum64 / m
    var = jnp.maximum(sq64 / m - mean * mean, 0.0)         # biased batch variance
    scale = gamma.astype(jnp.float32) * lax.rsqrt(var + BN_EPS)   # (64,)
    shift = beta.astype(jnp.float32) - mean * scale               # (64,)
    # BN scale folded into the block-diagonal weight; shift tiled to 256 lanes.
    w2s = jnp.kron(jnp.eye(PACK, dtype=jnp.float32), w_t * scale[None, :])  # (128,256)
    shift2 = jnp.tile(shift, PACK).reshape(1, C_PK_OUT)    # (1, 256)

    # ---- pass 2: y = xp @ (W*scale) + shift, ReLU, lane-dense store -------
    def norm_kernel(x_ref, w_ref, sh_ref, o_ref):
        y = jnp.dot(x_ref[...], w_ref[...], preferred_element_type=jnp.float32)
        o_ref[...] = jnp.maximum(y + sh_ref[...], 0.0).astype(o_ref.dtype)

    outp = pl.pallas_call(
        norm_kernel,
        grid=(num_tiles,),
        in_specs=[
            pl.BlockSpec((TMH, C_PK_IN), lambda i: (i, 0)),
            pl.BlockSpec((C_PK_IN, C_PK_OUT), lambda i: (0, 0)),   # VMEM-resident
            pl.BlockSpec((1, C_PK_OUT), lambda i: (0, 0)),
        ],
        out_specs=pl.BlockSpec((TMH, C_PK_OUT), lambda i: (i, 0)),
        out_shape=jax.ShapeDtypeStruct((Mh, C_PK_OUT), out_dtype),
        compiler_params=pltpu.CompilerParams(
            dimension_semantics=("parallel",),
            vmem_limit_bytes=VMEM_LIMIT),
    )(xp, w2s, shift2)

    # Unpack: (Mh, 256) row-major -> (Mpad, 64); slice only if we padded.
    out2d = outp.reshape(Mpad, C_OUT)
    if Mpad != M:
        out2d = out2d[:M]
    return out2d.reshape(N, L, C_OUT)


def reference_forward(x_nlc, w, b, gamma, beta):
    """Pure-JAX reference matching PyTorch MLP1B.forward (training-mode BN)."""
    y = jnp.einsum("nlc,oc->nlo", x_nlc, w, precision="highest") + b
    mean = jnp.mean(y, axis=(0, 1), keepdims=True)
    var = jnp.mean((y - mean) ** 2, axis=(0, 1), keepdims=True)
    y = (y - mean) / jnp.sqrt(var + BN_EPS) * gamma + beta
    return jnp.maximum(y, 0.0)


# TODO(synk): BatchNorm1d running_mean / running_var buffer updates (a
# training-mode side effect) are not materialized; they do not affect the
# forward output.

if __name__ == "__main__":
    key = jax.random.PRNGKey(0)
    k_x, k_w, k_b, k_g, k_beta = jax.random.split(key, 5)

    N, L = 2, 8
    x = jax.random.normal(k_x, (N, L, C_IN), dtype=jnp.float32)

    # Deterministic parameter init (PyTorch-Linear-style uniform bounds).
    bound = 1.0 / (C_IN ** 0.5)
    w = jax.random.uniform(k_w, (C_OUT, C_IN), jnp.float32, -bound, bound)
    b = jax.random.uniform(k_b, (C_OUT,), jnp.float32, -bound, bound)
    gamma = 1.0 + 0.1 * jax.random.normal(k_g, (C_OUT,), jnp.float32)
    beta = 0.1 * jax.random.normal(k_beta, (C_OUT,), jnp.float32)

    out = jax.jit(mlp1b_forward)(x, w, b, gamma, beta)
    out = jax.block_until_ready(out)

    ref = reference_forward(x, w, b, gamma, beta)
    assert out.shape == (N, L, C_OUT)
    # 1e-3: allows f32 accumulation-order / uncentered-variance differences
    # while still catching any real math/layout bug (those would be O(1)).
    assert jnp.allclose(out, ref, atol=1e-3, rtol=1e-3), "mismatch vs reference"

    print("KERNEL_OK")
</pallas_src>

<mosaic_0001>
module attributes {stable_mosaic.version = 11 : i64} {
  func.func @stats_kernel(%arg0: i32, %arg1: i32, %arg2: memref<8x128xf32, #tpu.memory_space<vmem>>, %arg3: memref<1x128x128xf32, #tpu.memory_space<vmem>>, %arg4: memref<1x1x128xf32, #tpu.memory_space<vmem>>) attributes {dimension_semantics = [#tpu.dimension_semantics<parallel>, #tpu.dimension_semantics<arbitrary>], iteration_bounds = array<i64: 2, 1>, scalar_prefetch = 0 : i64, scratch_operands = 0 : i64, tpu.core_type = #tpu.core_type<tc>, window_params = [{transform_indices = @transform_0, window_bounds = array<i64: 8, 128>}, {transform_indices = @transform_1, window_bounds = array<i64: 1, 128, 128>}, {transform_indices = @transform_2, window_bounds = array<i64: 1, 1, 128>}]} {
    %c0_i32 = arith.constant 0 : i32
    %0 = arith.cmpi eq, %arg1, %c0_i32 : i32
    %1 = arith.extui %0 : i1 to i32
    %c0_i32_0 = arith.constant 0 : i32
    %2 = arith.cmpi ne, %1, %c0_i32_0 : i32
    scf.if %2 {
      %cst = arith.constant 0.000000e+00 : f32
      %14 = vector.broadcast %cst : f32 to vector<128x128xf32>
      %c0_7 = arith.constant 0 : index
      %c0_8 = arith.constant 0 : index
      %c0_9 = arith.constant 0 : index
      %15 = vector.load %arg3[%c0_7, %c0_8, %c0_9] : memref<1x128x128xf32, #tpu.memory_space<vmem>>, vector<1x128x128xf32>
      %16 = vector.shape_cast %15 : vector<1x128x128xf32> to vector<128x128xf32>
      %17 = vector.shape_cast %14 : vector<128x128xf32> to vector<1x128x128xf32>
      tpu.vector_store %arg3[%c0_7, %c0_8, %c0_9], %17 {strides = array<i32>} : memref<1x128x128xf32, #tpu.memory_space<vmem>>, vector<1x128x128xf32>,
      %cst_10 = arith.constant 0.000000e+00 : f32
      %18 = vector.broadcast %cst_10 : f32 to vector<1x128xf32>
      %c0_11 = arith.constant 0 : index
      %c0_12 = arith.constant 0 : index
      %c0_13 = arith.constant 0 : index
      %19 = vector.load %arg4[%c0_11, %c0_12, %c0_13] : memref<1x1x128xf32, #tpu.memory_space<vmem>>, vector<1x1x128xf32>
      %20 = vector.shape_cast %19 : vector<1x1x128xf32> to vector<1x128xf32>
      %21 = vector.shape_cast %18 : vector<1x128xf32> to vector<1x1x128xf32>
      tpu.vector_store %arg4[%c0_11, %c0_12, %c0_13], %21 {strides = array<i32>} : memref<1x1x128xf32, #tpu.memory_space<vmem>>, vector<1x1x128xf32>,
    } else {
    }
    %c1_i32 = arith.constant 1 : i32
    %3 = arith.muli %arg0, %c1_i32 : i32
    %4 = arith.addi %3, %arg1 : i32
    %c8_i32 = arith.constant 8 : i32
    %5 = arith.muli %4, %c8_i32 : i32
    %c8_i32_1 = arith.constant 8 : i32
    %6 = arith.subi %c8_i32_1, %5 : i32
    %c0 = arith.constant 0 : index
    %c0_2 = arith.constant 0 : index
    %7 = vector.load %arg2[%c0, %c0_2] : memref<8x128xf32, #tpu.memory_space<vmem>>, vector<8x128xf32>
    %c8_i32_3 = arith.constant 8 : i32
    %8 = arith.cmpi sge, %6, %c8_i32_3 : i32
    %9 = arith.extui %8 : i1 to i32
    %c0_i32_4 = arith.constant 0 : i32
    %10 = arith.cmpi ne, %9, %c0_i32_4 : i32
    scf.if %10 {
      %c0_7 = arith.constant 0 : index
      %c0_8 = arith.constant 0 : index
      %c0_9 = arith.constant 0 : index
      %14 = vector.load %arg3[%c0_7, %c0_8, %c0_9] : memref<1x128x128xf32, #tpu.memory_space<vmem>>, vector<1x128x128xf32>
      %15 = vector.shape_cast %14 : vector<1x128x128xf32> to vector<128x128xf32>
      %cst = arith.constant dense<0.000000e+00> : vector<128x128xf32>
      %16 = tpu.matmul %7, %7, %cst {dimension_numbers = #tpu.dot_dimension_numbers<[0], [0], [1], [1], [0, 1, 1, 1], [], []>} : vector<8x128xf32>, vector<8x128xf32>, vector<128x128xf32> -> vector<128x128xf32>
      %17 = arith.addf %15, %16 : vector<128x128xf32>
      %c0_10 = arith.constant 0 : index
      %c0_11 = arith.constant 0 : index
      %c0_12 = arith.constant 0 : index
      %18 = vector.load %arg3[%c0_10, %c0_11, %c0_12] : memref<1x128x128xf32, #tpu.memory_space<vmem>>, vector<1x128x128xf32>
      %19 = vector.shape_cast %18 : vector<1x128x128xf32> to vector<128x128xf32>
      %20 = vector.shape_cast %17 : vector<128x128xf32> to vector<1x128x128xf32>
      tpu.vector_store %arg3[%c0_10, %c0_11, %c0_12], %20 {strides = array<i32>} : memref<1x128x128xf32, #tpu.memory_space<vmem>>, vector<1x128x128xf32>,
      %c0_13 = arith.constant 0 : index
      %c0_14 = arith.constant 0 : index
      %c0_15 = arith.constant 0 : index
      %21 = vector.load %arg4[%c0_13, %c0_14, %c0_15] : memref<1x1x128xf32, #tpu.memory_space<vmem>>, vector<1x1x128xf32>
      %22 = vector.shape_cast %21 : vector<1x1x128xf32> to vector<1x128xf32>
      %cst_16 = arith.constant dense<0.000000e+00> : vector<128xf32>
      %23 = vector.multi_reduction <add>, %7, %cst_16 [0] : vector<8x128xf32> to vector<128xf32>
      %24 = vector.shape_cast %23 : vector<128xf32> to vector<1x128xf32>
      %25 = arith.addf %22, %24 : vector<1x128xf32>
      %c0_17 = arith.constant 0 : index
      %c0_18 = arith.constant 0 : index
      %c0_19 = arith.constant 0 : index
      %26 = vector.load %arg4[%c0_17, %c0_18, %c0_19] : memref<1x1x128xf32, #tpu.memory_space<vmem>>, vector<1x1x128xf32>
      %27 = vector.shape_cast %26 : vector<1x1x128xf32> to vector<1x128xf32>
      %28 = vector.shape_cast %25 : vector<1x128xf32> to vector<1x1x128xf32>
      tpu.vector_store %arg4[%c0_17, %c0_18, %c0_19], %28 {strides = array<i32>} : memref<1x1x128xf32, #tpu.memory_space<vmem>>, vector<1x1x128xf32>,
    } else {
    }
    %c8_i32_5 = arith.constant 8 : i32
    %11 = arith.cmpi slt, %6, %c8_i32_5 : i32
    %12 = arith.extui %11 : i1 to i32
    %c0_i32_6 = arith.constant 0 : i32
    %13 = arith.cmpi ne, %12, %c0_i32_6 : i32
    scf.if %13 {
      %14 = tpu.iota {dimensions = array<i32: 0>} : vector<8x128xi32>
      %15 = vector.broadcast %6 : i32 to vector<8x128xi32>
      %16 = arith.cmpi slt, %14, %15 : vector<8x128xi32>
      %cst = arith.constant 0.000000e+00 : f32
      %17 = vector.broadcast %cst : f32 to vector<8x128xf32>
      %18 = arith.select %16, %7, %17 : vector<8x128xi1>, vector<8x128xf32>
      %c0_7 = arith.constant 0 : index
      %c0_8 = arith.constant 0 : index
      %c0_9 = arith.constant 0 : index
      %19 = vector.load %arg3[%c0_7, %c0_8, %c0_9] : memref<1x128x128xf32, #tpu.memory_space<vmem>>, vector<1x128x128xf32>
      %20 = vector.shape_cast %19 : vector<1x128x128xf32> to vector<128x128xf32>
      %cst_10 = arith.constant dense<0.000000e+00> : vector<128x128xf32>
      %21 = tpu.matmul %18, %18, %cst_10 {dimension_numbers = #tpu.dot_dimension_numbers<[0], [0], [1], [1], [0, 1, 1, 1], [], []>} : vector<8x128xf32>, vector<8x128xf32>, vector<128x128xf32> -> vector<128x128xf32>
      %22 = arith.addf %20, %21 : vector<128x128xf32>
      %c0_11 = arith.constant 0 : index
      %c0_12 = arith.constant 0 : index
      %c0_13 = arith.constant 0 : index
      %23 = vector.load %arg3[%c0_11, %c0_12, %c0_13] : memref<1x128x128xf32, #tpu.memory_space<vmem>>, vector<1x128x128xf32>
      %24 = vector.shape_cast %23 : vector<1x128x128xf32> to vector<128x128xf32>
      %25 = vector.shape_cast %22 : vector<128x128xf32> to vector<1x128x128xf32>
      tpu.vector_store %arg3[%c0_11, %c0_12, %c0_13], %25 {strides = array<i32>} : memref<1x128x128xf32, #tpu.memory_space<vmem>>, vector<1x128x128xf32>,
      %c0_14 = arith.constant 0 : index
      %c0_15 = arith.constant 0 : index
      %c0_16 = arith.constant 0 : index
      %26 = vector.load %arg4[%c0_14, %c0_15, %c0_16] : memref<1x1x128xf32, #tpu.memory_space<vmem>>, vector<1x1x128xf32>
      %27 = vector.shape_cast %26 : vector<1x1x128xf32> to vector<1x128xf32>
      %cst_17 = arith.constant dense<0.000000e+00> : vector<128xf32>
      %28 = vector.multi_reduction <add>, %18, %cst_17 [0] : vector<8x128xf32> to vector<128xf32>
      %29 = vector.shape_cast %28 : vector<128xf32> to vector<1x128xf32>
      %30 = arith.addf %27, %29 : vector<1x128xf32>
      %c0_18 = arith.constant 0 : index
      %c0_19 = arith.constant 0 : index
      %c0_20 = arith.constant 0 : index
      %31 = vector.load %arg4[%c0_18, %c0_19, %c0_20] : memref<1x1x128xf32, #tpu.memory_space<vmem>>, vector<1x1x128xf32>
      %32 = vector.shape_cast %31 : vector<1x1x128xf32> to vector<1x128xf32>
      %33 = vector.shape_cast %30 : vector<1x128xf32> to vector<1x1x128xf32>
      tpu.vector_store %arg4[%c0_18, %c0_19, %c0_20], %33 {strides = array<i32>} : memref<1x1x128xf32, #tpu.memory_space<vmem>>, vector<1x1x128xf32>,
    } else {
    }
    return
  }
  func.func @transform_0(%arg0: i32, %arg1: i32) -> (i32, i32) {
    %c1_i32 = arith.constant 1 : i32
    %0 = arith.muli %arg0, %c1_i32 : i32
    %1 = arith.addi %0, %arg1 : i32
    %c0_i32 = arith.constant 0 : i32
    %2 = arith.minsi %1, %c0_i32 : i32
    %c0_i32_0 = arith.constant 0 : i32
    %c0_i32_1 = arith.constant 0 : i32
    return %2, %c0_i32_0 : i32, i32
  }
  func.func @transform_1(%arg0: i32, %arg1: i32) -> (i32, i32, i32) {
    %c0_i32 = arith.constant 0 : i32
    %c0_i32_0 = arith.constant 0 : i32
    %c0_i32_1 = arith.constant 0 : i32
    return %arg0, %c0_i32, %c0_i32_0 : i32, i32, i32
  }
  func.func @transform_2(%arg0: i32, %arg1: i32) -> (i32, i32, i32) {
    %c0_i32 = arith.constant 0 : i32
    %c0_i32_0 = arith.constant 0 : i32
    %c0_i32_1 = arith.constant 0 : i32
    return %arg0, %c0_i32, %c0_i32_0 : i32, i32, i32
  }
}

module attributes {stable_mosaic.version = 11 : i64} {
  func.func @norm_kernel(%arg0: i32, %arg1: memref<8x128xf32, #tpu.memory_space<vmem>>, %arg2: memref<128x256xf32, #tpu.memory_space<vmem>>, %arg3: memref<1x256xf32, #tpu.memory_space<vmem>>, %arg4: memref<8x256xf32, #tpu.memory_space<vmem>>) attributes {dimension_semantics = [#tpu.dimension_semantics<parallel>], iteration_bounds = array<i64: 1>, scalar_prefetch = 0 : i64, scratch_operands = 0 : i64, tpu.core_type = #tpu.core_type<tc>, window_params = [{transform_indices = @transform_0, window_bounds = array<i64: 8, 128>}, {pipeline_mode = #tpu.pipeline_mode<synchronous>, transform_indices = @transform_1, window_bounds = array<i64: 128, 256>}, {pipeline_mode = #tpu.pipeline_mode<synchronous>, transform_indices = @transform_2, window_bounds = array<i64: 1, 256>}, {transform_indices = @transform_3, window_bounds = array<i64: 8, 256>}]} {
    %c0 = arith.constant 0 : index
    %c0_0 = arith.constant 0 : index
    %0 = vector.load %arg1[%c0, %c0_0] : memref<8x128xf32, #tpu.memory_space<vmem>>, vector<8x128xf32>
    %c0_1 = arith.constant 0 : index
    %c0_2 = arith.constant 0 : index
    %1 = vector.load %arg2[%c0_1, %c0_2] : memref<128x256xf32, #tpu.memory_space<vmem>>, vector<128x256xf32>
    %cst = arith.constant dense<0.000000e+00> : vector<8x256xf32>
    %2 = tpu.matmul %0, %1, %cst {dimension_numbers = #tpu.dot_dimension_numbers<[1], [0], [0], [1], [0, 0, 1, 1], [], []>} : vector<8x128xf32>, vector<128x256xf32>, vector<8x256xf32> -> vector<8x256xf32>
    %c0_3 = arith.constant 0 : index
    %c0_4 = arith.constant 0 : index
    %3 = vector.load %arg3[%c0_3, %c0_4] : memref<1x256xf32, #tpu.memory_space<vmem>>, vector<1x256xf32>
    %4 = vector.broadcast %3 : vector<1x256xf32> to vector<8x256xf32>
    %5 = arith.addf %2, %4 : vector<8x256xf32>
    %cst_5 = arith.constant 0.000000e+00 : f32
    %6 = vector.broadcast %cst_5 : f32 to vector<8x256xf32>
    %7 = arith.maximumf %5, %6 : vector<8x256xf32>
    %c0_6 = arith.constant 0 : index
    %c0_7 = arith.constant 0 : index
    %8 = vector.load %arg4[%c0_6, %c0_7] : memref<8x256xf32, #tpu.memory_space<vmem>>, vector<8x256xf32>
    tpu.vector_store %arg4[%c0_6, %c0_7], %7 {strides = array<i32>} : memref<8x256xf32, #tpu.memory_space<vmem>>, vector<8x256xf32>,
    return
  }
  func.func @transform_0(%arg0: i32) -> (i32, i32) {
    %c0_i32 = arith.constant 0 : i32
    %c0_i32_0 = arith.constant 0 : i32
    return %arg0, %c0_i32 : i32, i32
  }
  func.func @transform_1(%arg0: i32) -> (i32, i32) {
    %c0_i32 = arith.constant 0 : i32
    %c0_i32_0 = arith.constant 0 : i32
    %c0_i32_1 = arith.constant 0 : i32
    return %c0_i32, %c0_i32_0 : i32, i32
  }
  func.func @transform_2(%arg0: i32) -> (i32, i32) {
    %c0_i32 = arith.constant 0 : i32
    %c0_i32_0 = arith.constant 0 : i32
    %c0_i32_1 = arith.constant 0 : i32
    return %c0_i32, %c0_i32_0 : i32, i32
  }
  func.func @transform_3(%arg0: i32) -> (i32, i32) {
    %c0_i32 = arith.constant 0 : i32
    %c0_i32_0 = arith.constant 0 : i32
    return %arg0, %c0_i32 : i32, i32
  }
}

</mosaic_0001>

<llo_original>
// kernel: tile.8
$region0: #{tile.8}
  #allocation0 [shape = 's32[1]{0}', space=sflag, size = 0x4, scoped, tag = 'scoped memory for tile.8']
  %s0 = inlined_call_operand.vmem [shape: f32[64], index: 0, kind: input, shape index: {}]
  %s1 = inlined_call_operand.vmem [shape: f32[4,64], index: 1, kind: output, shape index: {}]
  // Predicated region
  $region2: #{tile.8} parent=0 // pred_check
    _
  $region3: #{tile.8} parent=0 // pred_check_branch
    %3 = sbr.rel (0) target = $region5
  $region4: #{tile.8} parent=0 // pred_region
    _
  $region5: #{tile.8} parent=0 // pred_fallthru
    _
  %v4 = vld [vmem:[%s0] ss:$0 sm:$0xff]
  %5 = vst [vmem:[%s1] sm:$0xf] %v4

// kernel: tile.9
$region0: #{tile.9}
  %s0 = inlined_call_operand.vmem [shape: f32[4,64], index: 0, kind: input, shape index: {}]
  %s1 = inlined_call_operand.vmem [shape: f32[1,256], index: 1, kind: output, shape index: {}]
  $region1: #{tile.9} parent=0
    #allocation0 [shape = 'u8[8192]{0}', space=vmem, size = 0x2000, scoped, tag = 'scoped mem for output reshape']
    #allocation1 [shape = 'u8[4096]{0}', space=vmem, size = 0x1000, scoped, tag = 'scoped mem for input reshape']
    %s3 = ssub.s32 16, 1
    %v4 = vld [vmem:[%s0] sm:%s3]
    %5 = vst [vmem:[#allocation1] sm:%s3] %v4
    %s6 = smov 3
    %v7 = vld [vmem:[#allocation1] ss:$2 sm:%s6]
    %vm8 = vcmask 523264
    %9 = vst.msk [vmem:[#allocation0] ss:$8 sm:$0x3] %vm8, %v7
    %s10 = scalar_lea.vmem [#allocation1], 1
    %s11 = smov 3
    %v12 = vld [vmem:[%s10] ss:$2 sm:%s11]
    %13 = vrot.lane.b32.xlu0 %v12, 64
    %v14 = vpop.permute.xlu0 %13
    %vm15 = vcmask 1048064
    %16 = vst.msk [vmem:[#allocation0] ss:$8 sm:$0x3] %vm15, %v14
    %s18 = ssub.s32 2, 1
    %v19 = vld [vmem:[#allocation0] sm:%s18]
    %s21 = ssub.s32 2, 1
    %22 = vst [vmem:[%s1] sm:%s21] %v19
    %s23 = scalar_lea.vmem [#allocation0], 8
    %v24 = vld [vmem:[%s23] sm:%s18]
    %s26 = ssub.s32 2, 1
    %s27 = scalar_lea.vmem %s1, 1
    %28 = vst [vmem:[%s27] sm:%s26] %v24

// kernel: mlp1b_forward.3
$region0: #{mlp1b_forward.3}
  #allocation0 [shape = 'u32[]', space=smem, size = 0x4, offset = 0x4, fixed_abs, tag = 'smem constant byte address 0x4 - core index']
  #allocation1 [shape = 'u32[72,128]{1,0:T(1,128)}', space=vmem, size = 0x9000, scoped, tag = 'internal scratch']
  %s0 = inlined_call_operand.vmem [shape: f32[8,128], index: 0, kind: input, shape index: {}]
  %s1 = inlined_call_operand.vmem [shape: f32[128,256], index: 1, kind: input, shape index: {}]
  %s2 = inlined_call_operand.vmem [shape: f32[1,256], index: 2, kind: input, shape index: {}]
  %s3 = inlined_call_operand.vmem [shape: f32[8,256], index: 3, kind: output, shape index: {}]
  %s4 = sld [smem:[#allocation0]]
  $region22: #{mlp1b_forward.3} parent=0
    _
  %s6 = ssub.s32 1, %s4
  %s7 = scalar_select 0, %s6, %s4
  // Predicated region
  $region2: #{mlp1b_forward.3} parent=0 // pred_check
    _
  $region3: #{mlp1b_forward.3} parent=0 // pred_check_branch
    %9 = sbr.rel (0) target = $region5
  $region4: #{mlp1b_forward.3} parent=0 // pred_region
    _
  $region5: #{mlp1b_forward.3} parent=0 // pred_fallthru
    _
  // Predicated region
  $region6: #{mlp1b_forward.3} parent=0 // pred_check
    _
  $region7: #{mlp1b_forward.3} parent=0 // pred_check_branch
    %11 = sbr.rel (0) target = $region9
  $region8: #{mlp1b_forward.3} parent=0 // pred_region
    _
  $region9: #{mlp1b_forward.3} parent=0 // pred_fallthru
    _
  // Predicated region
  $region10: #{mlp1b_forward.3} parent=0 // pred_check
    _
  $region11: #{mlp1b_forward.3} parent=0 // pred_check_branch
    %13 = sbr.rel (0) target = $region13
  $region12: #{mlp1b_forward.3} parent=0 // pred_region
    _
  $region13: #{mlp1b_forward.3} parent=0 // pred_fallthru
    _
  %v14 = vld [vmem:[%s0] sm:$0xff]
  %v15 = vld [vmem:[%s1] sm:$0xff]
  %v16 = vld [vmem:[%s1 + $0x8] sm:$0xff]
  %v17 = vld [vmem:[%s1 + $0x10] sm:$0xff]
  %v18 = vld [vmem:[%s1 + $0x18] sm:$0xff]
  %v19 = vld [vmem:[%s1 + $0x20] sm:$0xff]
  %v20 = vld [vmem:[%s1 + $0x28] sm:$0xff]
  %v21 = vld [vmem:[%s1 + $0x30] sm:$0xff]
  %v22 = vld [vmem:[%s1 + $0x38] sm:$0xff]
  %v23 = vld [vmem:[%s1 + $0x40] sm:$0xff]
  %v24 = vld [vmem:[%s1 + $0x48] sm:$0xff]
  %v25 = vld [vmem:[%s1 + $0x50] sm:$0xff]
  %v26 = vld [vmem:[%s1 + $0x58] sm:$0xff]
  %v27 = vld [vmem:[%s1 + $0x60] sm:$0xff]
  %v28 = vld [vmem:[%s1 + $0x68] sm:$0xff]
  %v29 = vld [vmem:[%s1 + $0x70] sm:$0xff]
  %v30 = vld [vmem:[%s1 + $0x78] sm:$0xff]
  %v31 = vld [vmem:[%s1 + $0x80] sm:$0xff]
  %v32 = vld [vmem:[%s1 + $0x88] sm:$0xff]
  %v33 = vld [vmem:[%s1 + $0x90] sm:$0xff]
  %v34 = vld [vmem:[%s1 + $0x98] sm:$0xff]
  %v35 = vld [vmem:[%s1 + $0xa0] sm:$0xff]
  %v36 = vld [vmem:[%s1 + $0xa8] sm:$0xff]
  %v37 = vld [vmem:[%s1 + $0xb0] sm:$0xff]
  %v38 = vld [vmem:[%s1 + $0xb8] sm:$0xff]
  %v39 = vld [vmem:[%s1 + $0xc0] sm:$0xff]
  %v40 = vld [vmem:[%s1 + $0xc8] sm:$0xff]
  %v41 = vld [vmem:[%s1 + $0xd0] sm:$0xff]
  %v42 = vld [vmem:[%s1 + $0xd8] sm:$0xff]
  %v43 = vld [vmem:[%s1 + $0xe0] sm:$0xff]
  %v44 = vld [vmem:[%s1 + $0xe8] sm:$0xff]
  %v45 = vld [vmem:[%s1 + $0xf0] sm:$0xff]
  %v46 = vld [vmem:[%s1 + $0xf8] sm:$0xff]
  %v47 = vld [vmem:[%s2] sm:$0x3]
  %v49 = vperm.slane %v47, 0
  %v50 = vperm.slane %v47, 1
  %53 = vmatpush.msra.mxu0 %v45
  %54 = vmatpush.msra.mxu0 %v43
  %55 = vmatpush.msra.mxu0 %v41
  %56 = vmatpush.msra.mxu0 %v39
  %57 = vmatpush.msra.mxu0 %v37
  %58 = vmatpush.msra.mxu0 %v35
  %59 = vmatpush.msra.mxu0 %v33
  %60 = vmatpush.msra.mxu0 %v31
  %61 = vmatpush.msra.mxu0 %v29
  %62 = vmatpush.msra.mxu0 %v27
  %63 = vmatpush.msra.mxu0 %v25
  %64 = vmatpush.msra.mxu0 %v23
  %65 = vmatpush.msra.mxu0 %v21
  %66 = vmatpush.msra.mxu0 %v19
  %67 = vmatpush.msra.mxu0 %v17
  %68 = vmatpush.msra.mxu0 %v15
  %69 = vmatmul.f32.gmra.mxu0 %v14
  %v70 = vpop.f32.mrf.mxu0
  %v71 = vadd.f32 %v49, %v70
  %72 = vdwg.mxu0
  %73 = vmatpush.msra.mxu0 %v46
  %74 = vmatpush.msra.mxu0 %v44
  %75 = vmatpush.msra.mxu0 %v42
  %76 = vmatpush.msra.mxu0 %v40
  %77 = vmatpush.msra.mxu0 %v38
  %78 = vmatpush.msra.mxu0 %v36
  %79 = vmatpush.msra.mxu0 %v34
  %80 = vmatpush.msra.mxu0 %v32
  %81 = vmatpush.msra.mxu0 %v30
  %82 = vmatpush.msra.mxu0 %v28
  %83 = vmatpush.msra.mxu0 %v26
  %84 = vmatpush.msra.mxu0 %v24
  %85 = vmatpush.msra.mxu0 %v22
  %86 = vmatpush.msra.mxu0 %v20
  %87 = vmatpush.msra.mxu0 %v18
  %88 = vmatpush.msra.mxu0 %v16
  %89 = vmatmul.f32.gmra.mxu0 %v14
  %v90 = vpop.f32.mrf.mxu0
  %v91 = vadd.f32 %v50, %v90
  %92 = vdwg.mxu0
  %v93 = vmax.f32 %v71, 0.0
  %v94 = vmax.f32 %v91, 0.0
  %95 = vst [vmem:[%s3] sm:$0xff] %v93
  %96 = vst [vmem:[%s3 + $0x8] sm:$0xff] %v94
  // Predicated region
  $region14: #{mlp1b_forward.3} parent=0 // pred_check
    _
  $region15: #{mlp1b_forward.3} parent=0 // pred_check_branch
    %98 = sbr.rel (0) target = $region17
  $region16: #{mlp1b_forward.3} parent=0 // pred_region
    _
  $region17: #{mlp1b_forward.3} parent=0 // pred_fallthru
    _
  // Predicated region
  $region18: #{mlp1b_forward.3} parent=0 // pred_check
    _
  $region19: #{mlp1b_forward.3} parent=0 // pred_check_branch
    %100 = sbr.rel (0) target = $region21
  $region20: #{mlp1b_forward.3} parent=0 // pred_region
    _
  $region21: #{mlp1b_forward.3} parent=0 // pred_fallthru
    _

// kernel: mlp1b_forward.2
$region0: #{mlp1b_forward.2}
  #allocation0 [shape = 'u32[]', space=smem, size = 0x4, offset = 0x4, fixed_abs, tag = 'smem constant byte address 0x4 - core index']
  #allocation1 [shape = 'u32[72,128]{1,0:T(1,128)}', space=vmem, size = 0x9000, scoped, tag = 'internal scratch']
  %s0 = inlined_call_operand.vmem [shape: f32[8,128], index: 0, kind: input, shape index: {}]
  %s1 = inlined_call_operand.vmem [shape: f32[2,128,128], index: 1, kind: output, shape index: {0}]
  %s2 = inlined_call_operand.vmem [shape: f32[2,1,128], index: 2, kind: output, shape index: {1}]
  %3 = xla_tuple %s1, %s2
  %s4 = sld [smem:[#allocation0]]
  $region57: #{mlp1b_forward.2} parent=0
    _
  %s6 = ssub.s32 1, %s4
  %s7 = scalar_select 0, %s6, %s4
  loop: start=0, step=1, limit=4
  $region2: #{mlp1b_forward.2} parent=0 // loop_pre_header
    _
  $region3: #{mlp1b_forward.2} parent=0 // loop_header
    %s9 = sphi 0, %s13
    %p10 = scmp.ge.s32.totalorder %s9, 4
    %s16 = sphi 0, %s28
    %s17 = sphi 0, %s24
    %s18 = sphi 0, %s16
    %s19 = sphi 0, %s17
    %s20 = sphi 0, %s18
    %s21 = sphi 0, %s19
    %s37 = sphi 0, %s39
    %s40 = sphi 0, %s37
    %s41 = sphi 0, %s40
    %s57 = sphi 0, %s41
    %s63 = sphi 0, %s65
    %s66 = sphi 0, %s63
    %s67 = sphi 0, %s66
    %s83 = sphi 0, %s67
    %s89 = sphi 0, %s91
    %s92 = sphi 0, %s89
    %s93 = sphi 0, %s92
    %s109 = sphi 0, %s93
  $region4: #{mlp1b_forward.2} parent=0 // loop_header_branch
    %12 = sbr.rel (%p10) target = $region8
  $region5: #{mlp1b_forward.2} parent=0 // loop_body
    %s14 = ssub.s32 %s9, 1
    %s15 = ssub.s32 %s9, 2
    %s22 = sadd.s32 1, %s17
    %p23 = scmp.ge.s32.totalorder %s22, 1
    %s24 = scalar_select %p23, 0, %s22
    %s25 = sadd.s32 1, %s16
    %s26 = scalar_select %p23, %s25, %s16
    %p27 = scmp.ge.s32.totalorder %s26, 2
    %s28 = scalar_select %p27, 0, %s26
    %s29 = sadd.s32 %s16, %s17
    %p30 = scmp.lt.s32.totalorder %s29, 0
    %s31 = scalar_select %p30, %s29, 0
    %s32 = sadd.s32 %s28, %s24
    %p33 = scmp.lt.s32.totalorder %s32, 0
    %s34 = scalar_select %p33, %s32, 0
    %s35 = ssub.s32 %s31, %s34
    %p36 = scmp.eq.s32.totalorder %s35, 0
    %s38 = sadd.s32 %s37, 1
    %s39 = scalar_select %p36, %s37, %s38
    %p42 = pneg %p36
    %p43 = scmp.eq.s32.totalorder %s9, 1
    %p44 = por %p42, %p43
    %p45 = scmp.ne.s32.totalorder %s37, %s40
    %p46 = scmp.eq.s32.totalorder %s9, 0
    %p47 = por %p45, %p46
    %p48 = scmp.ne.s32.totalorder %s37, %s40
    %p49 = scmp.eq.s32.totalorder %s14, 1
    %p50 = por %p48, %p49
    %p51 = scmp.ne.s32.totalorder %s40, %s41
    %p52 = scmp.eq.s32.totalorder %s14, 0
    %p53 = por %p51, %p52
    %p54 = scmp.ne.s32.totalorder %s40, %s41
    %p55 = scmp.eq.s32.totalorder %s15, 1
    %p56 = por %p54, %p55
    %p58 = scmp.ne.s32.totalorder %s41, %s57
    %p59 = scmp.eq.s32.totalorder %s15, 0
    %p60 = por %p58, %p59
    %s61 = ssub.s32 %s16, %s28
    %p62 = scmp.eq.s32.totalorder %s61, 0
    %s64 = sadd.s32 %s63, 1
    %s65 = scalar_select %p62, %s63, %s64
    %p68 = pneg %p62
    %p69 = scmp.eq.s32.totalorder %s9, 1
    %p70 = por %p68, %p69
    %p71 = scmp.ne.s32.totalorder %s63, %s66
    %p72 = scmp.eq.s32.totalorder %s9, 0
    %p73 = por %p71, %p72
    %p74 = scmp.ne.s32.totalorder %s63, %s66
    %p75 = scmp.eq.s32.totalorder %s14, 1
    %p76 = por %p74, %p75
    %p77 = scmp.ne.s32.totalorder %s66, %s67
    %p78 = scmp.eq.s32.totalorder %s14, 0
    %p79 = por %p77, %p78
    %p80 = scmp.ne.s32.totalorder %s66, %s67
    %p81 = scmp.eq.s32.totalorder %s15, 1
    %p82 = por %p80, %p81
    %p84 = scmp.ne.s32.totalorder %s67, %s83
    %p85 = scmp.eq.s32.totalorder %s15, 0
    %p86 = por %p84, %p85
    %s87 = ssub.s32 %s16, %s28
    %p88 = scmp.eq.s32.totalorder %s87, 0
    %s90 = sadd.s32 %s89, 1
    %s91 = scalar_select %p88, %s89, %s90
    %p94 = pneg %p88
    %p95 = scmp.eq.s32.totalorder %s9, 1
    %p96 = por %p94, %p95
    %p97 = scmp.ne.s32.totalorder %s89, %s92
    %p98 = scmp.eq.s32.totalorder %s9, 0
    %p99 = por %p97, %p98
    %p100 = scmp.ne.s32.totalorder %s89, %s92
    %p101 = scmp.eq.s32.totalorder %s14, 1
    %p102 = por %p100, %p101
    %p103 = scmp.ne.s32.totalorder %s92, %s93
    %p104 = scmp.eq.s32.totalorder %s14, 0
    %p105 = por %p103, %p104
    %p106 = scmp.ne.s32.totalorder %s92, %s93
    %p107 = scmp.eq.s32.totalorder %s15, 1
    %p108 = por %p106, %p107
    %p110 = scmp.ne.s32.totalorder %s93, %s109
    %p111 = scmp.eq.s32.totalorder %s15, 0
    %p112 = por %p110, %p111
    %p113 = scmp.le.s32.totalorder 1, %s9
    %p114 = scmp.lt.s32.totalorder %s9, 3
    %p115 = pnand %p113, %p114
    %p116 = pneg %p115
    // Predicated region
    $region9: #{mlp1b_forward.2} parent=5 // pred_check
      _
    $region10: #{mlp1b_forward.2} parent=5 // pred_check_branch
      %118 = sbr.rel (%p115) target = $region12
    $region11: #{mlp1b_forward.2} parent=5 // pred_region
      %s119 = ssub.s32 %s9, 1
    $region12: #{mlp1b_forward.2} parent=5 // pred_fallthru
      _
    %p120 = scmp.lt.s32.totalorder %s9, 2
    // Predicated region
    $region13: #{mlp1b_forward.2} parent=5 // pred_check
      %p121 = pneg %p120
    $region14: #{mlp1b_forward.2} parent=5 // pred_check_branch
      %123 = sbr.rel (%p121) target = $region16
    $region15: #{mlp1b_forward.2} parent=5 // pred_region
      // Predicated region
      $region17: #{mlp1b_forward.2} parent=15 // pred_check
        %p124 = pneg %p47
      $region18: #{mlp1b_forward.2} parent=15 // pred_check_branch
        %126 = sbr.rel (%p124) target = $region20
      $region19: #{mlp1b_forward.2} parent=15 // pred_region
        %s127 = sadd.s32 %s16, %s17
        %p128 = scmp.lt.s32.totalorder %s127, 0
        %s129 = scalar_select %p128, %s127, 0
        %p130 = scmp.lt.s32.totalorder %s129, 0
        %s131 = scalar_select %p130, %s129, 0
        %s132 = smul.addr %s131, 8
        %s133 = scalar_lea.vmem %s0, %s132
        %s134 = sadd.s32 %s16, %s17
        %p135 = scmp.lt.s32.totalorder %s134, 0
        %s136 = scalar_select %p135, %s134, 0
      $region20: #{mlp1b_forward.2} parent=15 // pred_fallthru
        _
    $region16: #{mlp1b_forward.2} parent=5 // pred_fallthru
      _
    %p137 = scmp.le.s32.totalorder 1, %s9
    %p138 = scmp.lt.s32.totalorder %s9, 3
    %p139 = pnand %p137, %p138
    %p140 = pneg %p139
    // Predicated region
    $region21: #{mlp1b_forward.2} parent=5 // pred_check
      _
    $region22: #{mlp1b_forward.2} parent=5 // pred_check_branch
      %142 = sbr.rel (%p139) target = $region24
    $region23: #{mlp1b_forward.2} parent=5 // pred_region
      %s143 = ssub.s32 %s9, 1
      %s144 = sadd.s32 %s18, %s19
      %p145 = scmp.lt.s32.totalorder %s144, 0
      %s146 = scalar_select %p145, %s144, 0
      %p147 = scmp.lt.s32.totalorder %s146, 0
      %s148 = scalar_select %p147, %s146, 0
      %s149 = smul.addr %s148, 8
      %s150 = scalar_lea.vmem %s0, %s149
      %p151 = pneg %p53
      %p152 = pneg %p50
      %p153 = pneg %p79
      %p154 = pneg %p76
      %p155 = scmp.lt.s32.totalorder %s18, 1
      %s156 = scalar_select %p155, %s18, 1
      %s157 = smul.addr %s156, 16
      %s158 = smul.addr %s157, 8
      %s159 = scalar_lea.vmem %s1, %s158
      %p160 = pneg %p105
      %p161 = pneg %p102
      %p162 = scmp.lt.s32.totalorder %s18, 1
      %s163 = scalar_select %p162, %s18, 1
      %s164 = scalar_lea.vmem %s2, %s163
      %s165 = sadd.s32 %s18, %s19
      %p166 = scmp.lt.s32.totalorder %s165, 0
      %s167 = scalar_select %p166, %s165, 0
      %p168 = scmp.lt.s32.totalorder %s167, 0
      %s169 = scalar_select %p168, %s167, 0
      %s170 = smul.addr %s169, 8
      %s171 = scalar_lea.vmem %s0, %s170
      %s172 = sadd.s32 %s18, %s19
      %p173 = scmp.lt.s32.totalorder %s172, 0
      %s174 = scalar_select %p173, %s172, 0
      %p175 = scmp.lt.s32.totalorder %s18, 1
      %s176 = scalar_select %p175, %s18, 1
      %s177 = smul.addr %s176, 16
      %s178 = smul.addr %s177, 8
      %s179 = scalar_lea.vmem %s1, %s178
      %p180 = scmp.lt.s32.totalorder %s18, 1
      %s181 = scalar_select %p180, %s18, 1
      %s182 = scalar_lea.vmem %s2, %s181
      %p183 = scmp.eq.s32.totalorder %s19, 0
      // Predicated region
      $region25: #{mlp1b_forward.2} parent=23 // pred_check
        %p184 = pneg %p183
      $region26: #{mlp1b_forward.2} parent=23 // pred_check_branch
        %186 = sbr.rel (%p184) target = $region28
      $region27: #{mlp1b_forward.2} parent=23 // pred_region
        %187 = vst [vmem:[%s179] sm:$0xff] 0.0
        %188 = vst [vmem:[%s179 + $0x8] sm:$0xff] 0.0
        %189 = vst [vmem:[%s179 + $0x10] sm:$0xff] 0.0
        %190 = vst [vmem:[%s179 + $0x18] sm:$0xff] 0.0
        %191 = vst [vmem:[%s179 + $0x20] sm:$0xff] 0.0
        %192 = vst [vmem:[%s179 + $0x28] sm:$0xff] 0.0
        %193 = vst [vmem:[%s179 + $0x30] sm:$0xff] 0.0
        %194 = vst [vmem:[%s179 + $0x38] sm:$0xff] 0.0
        %195 = vst [vmem:[%s179 + $0x40] sm:$0xff] 0.0
        %196 = vst [vmem:[%s179 + $0x48] sm:$0xff] 0.0
        %197 = vst [vmem:[%s179 + $0x50] sm:$0xff] 0.0
        %198 = vst [vmem:[%s179 + $0x58] sm:$0xff] 0.0
        %199 = vst [vmem:[%s179 + $0x60] sm:$0xff] 0.0
        %200 = vst [vmem:[%s179 + $0x68] sm:$0xff] 0.0
        %201 = vst [vmem:[%s179 + $0x70] sm:$0xff] 0.0
        %202 = vst [vmem:[%s179 + $0x78] sm:$0xff] 0.0
        %203 = vst [vmem:[%s182] sm:$0x1] 0.0
      $region28: #{mlp1b_forward.2} parent=23 // pred_fallthru
        _
      %s204 = sadd.s32 %s18, %s19
      %s205 = smul.u32 %s204, 8
      %s206 = ssub.s32 8, %s205
      %v207 = vld [vmem:[%s171] sm:$0xff]
      %p208 = scmp.ge.s32.totalorder %s206, 8
      // Predicated region
      $region29: #{mlp1b_forward.2} parent=23 // pred_check
        %p209 = pneg %p208
      $region30: #{mlp1b_forward.2} parent=23 // pred_check_branch
        %211 = sbr.rel (%p209) target = $region32
      $region31: #{mlp1b_forward.2} parent=23 // pred_region
        %v212 = vld [vmem:[%s179] sm:$0xff]
        %v213 = vld [vmem:[%s179 + $0x8] sm:$0xff]
        %v214 = vld [vmem:[%s179 + $0x10] sm:$0xff]
        %v215 = vld [vmem:[%s179 + $0x18] sm:$0xff]
        %v216 = vld [vmem:[%s179 + $0x20] sm:$0xff]
        %v217 = vld [vmem:[%s179 + $0x28] sm:$0xff]
        %v218 = vld [vmem:[%s179 + $0x30] sm:$0xff]
        %v219 = vld [vmem:[%s179 + $0x38] sm:$0xff]
        %v220 = vld [vmem:[%s179 + $0x40] sm:$0xff]
        %v221 = vld [vmem:[%s179 + $0x48] sm:$0xff]
        %v222 = vld [vmem:[%s179 + $0x50] sm:$0xff]
        %v223 = vld [vmem:[%s179 + $0x58] sm:$0xff]
        %v224 = vld [vmem:[%s179 + $0x60] sm:$0xff]
        %v225 = vld [vmem:[%s179 + $0x68] sm:$0xff]
        %v226 = vld [vmem:[%s179 + $0x70] sm:$0xff]
        %v227 = vld [vmem:[%s179 + $0x78] sm:$0xff]
        %228 = vxpose.xlu0.b32.start [1/16] %v207, 128
        %229 = vxpose.xlu0.b32.cont [2/16] 0.0, 128
        %230 = vxpose.xlu0.b32.cont [3/16] 0.0, 128
        %231 = vxpose.xlu0.b32.cont [4/16] 0.0, 128
        %232 = vxpose.xlu0.b32.cont [5/16] 0.0, 128
        %233 = vxpose.xlu0.b32.cont [6/16] 0.0, 128
        %234 = vxpose.xlu0.b32.cont [7/16] 0.0, 128
        %235 = vxpose.xlu0.b32.cont [8/16] 0.0, 128
        %236 = vxpose.xlu0.b32.cont [9/16] 0.0, 128
        %237 = vxpose.xlu0.b32.cont [10/16] 0.0, 128
        %238 = vxpose.xlu0.b32.cont [11/16] 0.0, 128
        %239 = vxpose.xlu0.b32.cont [12/16] 0.0, 128
        %240 = vxpose.xlu0.b32.cont [13/16] 0.0, 128
        %241 = vxpose.xlu0.b32.cont [14/16] 0.0, 128
        %242 = vxpose.xlu0.b32.cont [15/16] 0.0, 128
        %243 = vxpose.xlu0.b32.end [16/16] 0.0, 128
        %v244 = vpop.trf.xlu0
        %v245 = vpop.trf.xlu0
        %v246 = vpop.trf.xlu0
        %v247 = vpop.trf.xlu0
        %v248 = vpop.trf.xlu0
        %v249 = vpop.trf.xlu0
        %v250 = vpop.trf.xlu0
        %v251 = vpop.trf.xlu0
        %v252 = vpop.trf.xlu0
        %v253 = vpop.trf.xlu0
        %v254 = vpop.trf.xlu0
        %v255 = vpop.trf.xlu0
        %v256 = vpop.trf.xlu0
        %v257 = vpop.trf.xlu0
        %v258 = vpop.trf.xlu0
        %v259 = vpop.trf.xlu0
        %vm260 = vcmask 64512
        %v262 = vsel %vm260, %v244, 0
        %v265 = vsel %vm260, %v245, 0
        %v268 = vsel %vm260, %v246, 0
        %v271 = vsel %vm260, %v247, 0
        %v274 = vsel %vm260, %v248, 0
        %v277 = vsel %vm260, %v249, 0
        %v280 = vsel %vm260, %v250, 0
        %v283 = vsel %vm260, %v251, 0
        %v286 = vsel %vm260, %v252, 0
        %v289 = vsel %vm260, %v253, 0
        %v292 = vsel %vm260, %v254, 0
        %v295 = vsel %vm260, %v255, 0
        %v298 = vsel %vm260, %v256, 0
        %v301 = vsel %vm260, %v257, 0
        %v304 = vsel %vm260, %v258, 0
        %v307 = vsel %vm260, %v259, 0
        %309 = vmatpush.msra.mxu0 0.0
        %310 = vmatpush.msra.mxu0 0.0
        %311 = vmatpush.msra.mxu0 0.0
        %312 = vmatpush.msra.mxu0 0.0
        %313 = vmatpush.msra.mxu0 0.0
        %314 = vmatpush.msra.mxu0 0.0
        %315 = vmatpush.msra.mxu0 0.0
        %316 = vmatpush.msra.mxu0 0.0
        %317 = vmatpush.msra.mxu0 0.0
        %318 = vmatpush.msra.mxu0 0.0
        %319 = vmatpush.msra.mxu0 0.0
        %320 = vmatpush.msra.mxu0 0.0
        %321 = vmatpush.msra.mxu0 0.0
        %322 = vmatpush.msra.mxu0 0.0
        %323 = vmatpush.msra.mxu0 0.0
        %324 = vmatpush.msra.mxu0 %v207
        %325 = vmatmul.f32.gmra.mxu0 %v262
        %v326 = vpop.f32.mrf.mxu0
        %v327 = vadd.f32 0.0, %v326
        %328 = vmatmul.f32.gmra.mxu0 %v265
        %v329 = vpop.f32.mrf.mxu0
        %v330 = vadd.f32 0.0, %v329
        %331 = vmatmul.f32.gmra.mxu0 %v268
        %v332 = vpop.f32.mrf.mxu0
        %v333 = vadd.f32 0.0, %v332
        %334 = vmatmul.f32.gmra.mxu0 %v271
        %v335 = vpop.f32.mrf.mxu0
        %v336 = vadd.f32 0.0, %v335
        %337 = vmatmul.f32.gmra.mxu0 %v274
        %v338 = vpop.f32.mrf.mxu0
        %v339 = vadd.f32 0.0, %v338
        %340 = vmatmul.f32.gmra.mxu0 %v277
        %v341 = vpop.f32.mrf.mxu0
        %v342 = vadd.f32 0.0, %v341
        %343 = vmatmul.f32.gmra.mxu0 %v280
        %v344 = vpop.f32.mrf.mxu0
        %v345 = vadd.f32 0.0, %v344
        %346 = vmatmul.f32.gmra.mxu0 %v283
        %v347 = vpop.f32.mrf.mxu0
        %v348 = vadd.f32 0.0, %v347
        %349 = vmatmul.f32.gmra.mxu0 %v286
        %v350 = vpop.f32.mrf.mxu0
        %v351 = vadd.f32 0.0, %v350
        %352 = vmatmul.f32.gmra.mxu0 %v289
        %v353 = vpop.f32.mrf.mxu0
        %v354 = vadd.f32 0.0, %v353
        %355 = vmatmul.f32.gmra.mxu0 %v292
        %v356 = vpop.f32.mrf.mxu0
        %v357 = vadd.f32 0.0, %v356
        %358 = vmatmul.f32.gmra.mxu0 %v295
        %v359 = vpop.f32.mrf.mxu0
        %v360 = vadd.f32 0.0, %v359
        %361 = vmatmul.f32.gmra.mxu0 %v298
        %v362 = vpop.f32.mrf.mxu0
        %v363 = vadd.f32 0.0, %v362
        %364 = vmatmul.f32.gmra.mxu0 %v301
        %v365 = vpop.f32.mrf.mxu0
        %v366 = vadd.f32 0.0, %v365
        %367 = vmatmul.f32.gmra.mxu0 %v304
        %v368 = vpop.f32.mrf.mxu0
        %v369 = vadd.f32 0.0, %v368
        %370 = vmatmul.f32.gmra.mxu0 %v307
        %v371 = vpop.f32.mrf.mxu0
        %v372 = vadd.f32 0.0, %v371
        %373 = vdwg.mxu0
        %v374 = vadd.f32 %v212, %v327
        %v375 = vadd.f32 %v213, %v330
        %v376 = vadd.f32 %v214, %v333
        %v377 = vadd.f32 %v215, %v336
        %v378 = vadd.f32 %v216, %v339
        %v379 = vadd.f32 %v217, %v342
        %v380 = vadd.f32 %v218, %v345
        %v381 = vadd.f32 %v219, %v348
        %v382 = vadd.f32 %v220, %v351
        %v383 = vadd.f32 %v221, %v354
        %v384 = vadd.f32 %v222, %v357
        %v385 = vadd.f32 %v223, %v360
        %v386 = vadd.f32 %v224, %v363
        %v387 = vadd.f32 %v225, %v366
        %v388 = vadd.f32 %v226, %v369
        %v389 = vadd.f32 %v227, %v372
        %390 = vst [vmem:[%s179] sm:$0xff] %v374
        %391 = vst [vmem:[%s179 + $0x8] sm:$0xff] %v375
        %392 = vst [vmem:[%s179 + $0x10] sm:$0xff] %v376
        %393 = vst [vmem:[%s179 + $0x18] sm:$0xff] %v377
        %394 = vst [vmem:[%s179 + $0x20] sm:$0xff] %v378
        %395 = vst [vmem:[%s179 + $0x28] sm:$0xff] %v379
        %396 = vst [vmem:[%s179 + $0x30] sm:$0xff] %v380
        %397 = vst [vmem:[%s179 + $0x38] sm:$0xff] %v381
        %398 = vst [vmem:[%s179 + $0x40] sm:$0xff] %v382
        %399 = vst [vmem:[%s179 + $0x48] sm:$0xff] %v383
        %400 = vst [vmem:[%s179 + $0x50] sm:$0xff] %v384
        %401 = vst [vmem:[%s179 + $0x58] sm:$0xff] %v385
        %402 = vst [vmem:[%s179 + $0x60] sm:$0xff] %v386
        %403 = vst [vmem:[%s179 + $0x68] sm:$0xff] %v387
        %404 = vst [vmem:[%s179 + $0x70] sm:$0xff] %v388
        %405 = vst [vmem:[%s179 + $0x78] sm:$0xff] %v389
        %v406 = vld [vmem:[%s182] sm:$0x1]
        %v407 = vrot.slane %v207, 4
        %v408 = vadd.f32 %v207, %v407
        %v409 = vrot.slane %v408, 2
        %v410 = vadd.f32 %v408, %v409
        %v411 = vrot.slane %v410, 1
        %v412 = vadd.f32 %v410, %v411
        %v413 = vadd.f32 %v406, %v412
        %414 = vst [vmem:[%s182] sm:$0x1] %v413
      $region32: #{mlp1b_forward.2} parent=23 // pred_fallthru
        _
      %p415 = scmp.lt.s32.totalorder %s206, 8
      // Predicated region
      $region33: #{mlp1b_forward.2} parent=23 // pred_check
        %p416 = pneg %p415
      $region34: #{mlp1b_forward.2} parent=23 // pred_check_branch
        %418 = sbr.rel (%p416) target = $region36
      $region35: #{mlp1b_forward.2} parent=23 // pred_region
        %v419 = vlaneseq
        %v420 = vshrl.u32 %v419, 7
        %v421 = vstv %s206
        %vm422 = vcmp.lt.s32.totalorder %v420, %v421
        %v423 = vsel %vm422, %v207, 0.0
        %v424 = vld [vmem:[%s179] sm:$0xff]
        %v425 = vld [vmem:[%s179 + $0x8] sm:$0xff]
        %v426 = vld [vmem:[%s179 + $0x10] sm:$0xff]
        %v427 = vld [vmem:[%s179 + $0x18] sm:$0xff]
        %v428 = vld [vmem:[%s179 + $0x20] sm:$0xff]
        %v429 = vld [vmem:[%s179 + $0x28] sm:$0xff]
        %v430 = vld [vmem:[%s179 + $0x30] sm:$0xff]
        %v431 = vld [vmem:[%s179 + $0x38] sm:$0xff]
        %v432 = vld [vmem:[%s179 + $0x40] sm:$0xff]
        %v433 = vld [vmem:[%s179 + $0x48] sm:$0xff]
        %v434 = vld [vmem:[%s179 + $0x50] sm:$0xff]
        %v435 = vld [vmem:[%s179 + $0x58] sm:$0xff]
        %v436 = vld [vmem:[%s179 + $0x60] sm:$0xff]
        %v437 = vld [vmem:[%s179 + $0x68] sm:$0xff]
        %v438 = vld [vmem:[%s179 + $0x70] sm:$0xff]
        %v439 = vld [vmem:[%s179 + $0x78] sm:$0xff]
        %440 = vxpose.xlu0.b32.start [1/16] %v423, 128
        %441 = vxpose.xlu0.b32.cont [2/16] 0.0, 128
        %442 = vxpose.xlu0.b32.cont [3/16] 0.0, 128
        %443 = vxpose.xlu0.b32.cont [4/16] 0.0, 128
        %444 = vxpose.xlu0.b32.cont [5/16] 0.0, 128
        %445 = vxpose.xlu0.b32.cont [6/16] 0.0, 128
        %446 = vxpose.xlu0.b32.cont [7/16] 0.0, 128
        %447 = vxpose.xlu0.b32.cont [8/16] 0.0, 128
        %448 = vxpose.xlu0.b32.cont [9/16] 0.0, 128
        %449 = vxpose.xlu0.b32.cont [10/16] 0.0, 128
        %450 = vxpose.xlu0.b32.cont [11/16] 0.0, 128
        %451 = vxpose.xlu0.b32.cont [12/16] 0.0, 128
        %452 = vxpose.xlu0.b32.cont [13/16] 0.0, 128
        %453 = vxpose.xlu0.b32.cont [14/16] 0.0, 128
        %454 = vxpose.xlu0.b32.cont [15/16] 0.0, 128
        %455 = vxpose.xlu0.b32.end [16/16] 0.0, 128
        %v456 = vpop.trf.xlu0
        %v457 = vpop.trf.xlu0
        %v458 = vpop.trf.xlu0
        %v459 = vpop.trf.xlu0
        %v460 = vpop.trf.xlu0
        %v461 = vpop.trf.xlu0
        %v462 = vpop.trf.xlu0
        %v463 = vpop.trf.xlu0
        %v464 = vpop.trf.xlu0
        %v465 = vpop.trf.xlu0
        %v466 = vpop.trf.xlu0
        %v467 = vpop.trf.xlu0
        %v468 = vpop.trf.xlu0
        %v469 = vpop.trf.xlu0
        %v470 = vpop.trf.xlu0
        %v471 = vpop.trf.xlu0
        %vm472 = vcmask 64512
        %v474 = vsel %vm472, %v456, 0
        %v477 = vsel %vm472, %v457, 0
        %v480 = vsel %vm472, %v458, 0
        %v483 = vsel %vm472, %v459, 0
        %v486 = vsel %vm472, %v460, 0
        %v489 = vsel %vm472, %v461, 0
        %v492 = vsel %vm472, %v462, 0
        %v495 = vsel %vm472, %v463, 0
        %v498 = vsel %vm472, %v464, 0
        %v501 = vsel %vm472, %v465, 0
        %v504 = vsel %vm472, %v466, 0
        %v507 = vsel %vm472, %v467, 0
        %v510 = vsel %vm472, %v468, 0
        %v513 = vsel %vm472, %v469, 0
        %v516 = vsel %vm472, %v470, 0
        %v519 = vsel %vm472, %v471, 0
        %521 = vmatpush.msra.mxu0 0.0
        %522 = vmatpush.msra.mxu0 0.0
        %523 = vmatpush.msra.mxu0 0.0
        %524 = vmatpush.msra.mxu0 0.0
        %525 = vmatpush.msra.mxu0 0.0
        %526 = vmatpush.msra.mxu0 0.0
        %527 = vmatpush.msra.mxu0 0.0
        %528 = vmatpush.msra.mxu0 0.0
        %529 = vmatpush.msra.mxu0 0.0
        %530 = vmatpush.msra.mxu0 0.0
        %531 = vmatpush.msra.mxu0 0.0
        %532 = vmatpush.msra.mxu0 0.0
        %533 = vmatpush.msra.mxu0 0.0
        %534 = vmatpush.msra.mxu0 0.0
        %535 = vmatpush.msra.mxu0 0.0
        %536 = vmatpush.msra.mxu0 %v423
        %537 = vmatmul.f32.gmra.mxu0 %v474
        %v538 = vpop.f32.mrf.mxu0
        %v539 = vadd.f32 0.0, %v538
        %540 = vmatmul.f32.gmra.mxu0 %v477
        %v541 = vpop.f32.mrf.mxu0
        %v542 = vadd.f32 0.0, %v541
        %543 = vmatmul.f32.gmra.mxu0 %v480
        %v544 = vpop.f32.mrf.mxu0
        %v545 = vadd.f32 0.0, %v544
        %546 = vmatmul.f32.gmra.mxu0 %v483
        %v547 = vpop.f32.mrf.mxu0
        %v548 = vadd.f32 0.0, %v547
        %549 = vmatmul.f32.gmra.mxu0 %v486
        %v550 = vpop.f32.mrf.mxu0
        %v551 = vadd.f32 0.0, %v550
        %552 = vmatmul.f32.gmra.mxu0 %v489
        %v553 = vpop.f32.mrf.mxu0
        %v554 = vadd.f32 0.0, %v553
        %555 = vmatmul.f32.gmra.mxu0 %v492
        %v556 = vpop.f32.mrf.mxu0
        %v557 = vadd.f32 0.0, %v556
        %558 = vmatmul.f32.gmra.mxu0 %v495
        %v559 = vpop.f32.mrf.mxu0
        %v560 = vadd.f32 0.0, %v559
        %561 = vmatmul.f32.gmra.mxu0 %v498
        %v562 = vpop.f32.mrf.mxu0
        %v563 = vadd.f32 0.0, %v562
        %564 = vmatmul.f32.gmra.mxu0 %v501
        %v565 = vpop.f32.mrf.mxu0
        %v566 = vadd.f32 0.0, %v565
        %567 = vmatmul.f32.gmra.mxu0 %v504
        %v568 = vpop.f32.mrf.mxu0
        %v569 = vadd.f32 0.0, %v568
        %570 = vmatmul.f32.gmra.mxu0 %v507
        %v571 = vpop.f32.mrf.mxu0
        %v572 = vadd.f32 0.0, %v571
        %573 = vmatmul.f32.gmra.mxu0 %v510
        %v574 = vpop.f32.mrf.mxu0
        %v575 = vadd.f32 0.0, %v574
        %576 = vmatmul.f32.gmra.mxu0 %v513
        %v577 = vpop.f32.mrf.mxu0
        %v578 = vadd.f32 0.0, %v577
        %579 = vmatmul.f32.gmra.mxu0 %v516
        %v580 = vpop.f32.mrf.mxu0
        %v581 = vadd.f32 0.0, %v580
        %582 = vmatmul.f32.gmra.mxu0 %v519
        %v583 = vpop.f32.mrf.mxu0
        %v584 = vadd.f32 0.0, %v583
        %585 = vdwg.mxu0
        %v586 = vadd.f32 %v424, %v539
        %v587 = vadd.f32 %v425, %v542
        %v588 = vadd.f32 %v426, %v545
        %v589 = vadd.f32 %v427, %v548
        %v590 = vadd.f32 %v428, %v551
        %v591 = vadd.f32 %v429, %v554
        %v592 = vadd.f32 %v430, %v557
        %v593 = vadd.f32 %v431, %v560
        %v594 = vadd.f32 %v432, %v563
        %v595 = vadd.f32 %v433, %v566
        %v596 = vadd.f32 %v434, %v569
        %v597 = vadd.f32 %v435, %v572
        %v598 = vadd.f32 %v436, %v575
        %v599 = vadd.f32 %v437, %v578
        %v600 = vadd.f32 %v438, %v581
        %v601 = vadd.f32 %v439, %v584
        %602 = vst [vmem:[%s179] sm:$0xff] %v586
        %603 = vst [vmem:[%s179 + $0x8] sm:$0xff] %v587
        %604 = vst [vmem:[%s179 + $0x10] sm:$0xff] %v588
        %605 = vst [vmem:[%s179 + $0x18] sm:$0xff] %v589
        %606 = vst [vmem:[%s179 + $0x20] sm:$0xff] %v590
        %607 = vst [vmem:[%s179 + $0x28] sm:$0xff] %v591
        %608 = vst [vmem:[%s179 + $0x30] sm:$0xff] %v592
        %609 = vst [vmem:[%s179 + $0x38] sm:$0xff] %v593
        %610 = vst [vmem:[%s179 + $0x40] sm:$0xff] %v594
        %611 = vst [vmem:[%s179 + $0x48] sm:$0xff] %v595
        %612 = vst [vmem:[%s179 + $0x50] sm:$0xff] %v596
        %613 = vst [vmem:[%s179 + $0x58] sm:$0xff] %v597
        %614 = vst [vmem:[%s179 + $0x60] sm:$0xff] %v598
        %615 = vst [vmem:[%s179 + $0x68] sm:$0xff] %v599
        %616 = vst [vmem:[%s179 + $0x70] sm:$0xff] %v600
        %617 = vst [vmem:[%s179 + $0x78] sm:$0xff] %v601
        %v618 = vld [vmem:[%s182] sm:$0x1]
        %v619 = vrot.slane %v423, 4
        %v620 = vadd.f32 %v423, %v619
        %v621 = vrot.slane %v620, 2
        %v622 = vadd.f32 %v620, %v621
        %v623 = vrot.slane %v622, 1
        %v624 = vadd.f32 %v622, %v623
        %v625 = vadd.f32 %v618, %v624
        %626 = vst [vmem:[%s182] sm:$0x1] %v625
      $region36: #{mlp1b_forward.2} parent=23 // pred_fallthru
        _
      %p627 = scmp.lt.s32.totalorder %s18, 1
      %s628 = scalar_select %p627, %s18, 1
      %s629 = smul.addr %s628, 16
      %s630 = smul.addr %s629, 8
      %s631 = scalar_lea.vmem %s1, %s630
      %p632 = scmp.lt.s32.totalorder %s18, 1
      %s633 = scalar_select %p632, %s18, 1
      %s634 = scalar_lea.vmem %s2, %s633
      // Predicated region
      $region37: #{mlp1b_forward.2} parent=23 // pred_check
        %p635 = pneg %p76
      $region38: #{mlp1b_forward.2} parent=23 // pred_check_branch
        %637 = sbr.rel (%p635) target = $region40
      $region39: #{mlp1b_forward.2} parent=23 // pred_region
        _
      $region40: #{mlp1b_forward.2} parent=23 // pred_fallthru
        _
      // Predicated region
      $region41: #{mlp1b_forward.2} parent=23 // pred_check
        %p638 = pneg %p102
      $region42: #{mlp1b_forward.2} parent=23 // pred_check_branch
        %640 = sbr.rel (%p638) target = $region44
      $region43: #{mlp1b_forward.2} parent=23 // pred_region
        _
      $region44: #{mlp1b_forward.2} parent=23 // pred_fallthru
        _
    $region24: #{mlp1b_forward.2} parent=5 // pred_fallthru
      _
    %p641 = scmp.le.s32.totalorder 2, %s9
    // Predicated region
    $region45: #{mlp1b_forward.2} parent=5 // pred_check
      %p642 = pneg %p641
    $region46: #{mlp1b_forward.2} parent=5 // pred_check_branch
      %644 = sbr.rel (%p642) target = $region48
    $region47: #{mlp1b_forward.2} parent=5 // pred_region
      %s645 = ssub.s32 %s9, 2
      // Predicated region
      $region49: #{mlp1b_forward.2} parent=47 // pred_check
        %p646 = pneg %p82
      $region50: #{mlp1b_forward.2} parent=47 // pred_check_branch
        %648 = sbr.rel (%p646) target = $region52
      $region51: #{mlp1b_forward.2} parent=47 // pred_region
        %p649 = scmp.lt.s32.totalorder %s20, 1
        %s650 = scalar_select %p649, %s20, 1
        %s651 = smul.addr %s650, 16
        %s652 = smul.addr %s651, 8
        %s653 = scalar_lea.vmem %s1, %s652
      $region52: #{mlp1b_forward.2} parent=47 // pred_fallthru
        _
      // Predicated region
      $region53: #{mlp1b_forward.2} parent=47 // pred_check
        %p654 = pneg %p108
      $region54: #{mlp1b_forward.2} parent=47 // pred_check_branch
        %656 = sbr.rel (%p654) target = $region56
      $region55: #{mlp1b_forward.2} parent=47 // pred_region
        %p657 = scmp.lt.s32.totalorder %s20, 1
        %s658 = scalar_select %p657, %s20, 1
        %s659 = scalar_lea.vmem %s2, %s658
      $region56: #{mlp1b_forward.2} parent=47 // pred_fallthru
        _
    $region48: #{mlp1b_forward.2} parent=5 // pred_fallthru
      _
  $region6: #{mlp1b_forward.2} parent=0 // loop_footer
    %s13 = sadd.s32 1, %s9
  $region7: #{mlp1b_forward.2} parent=0 // loop_footer_branch
    %8 = sbr.rel target = $region3
  $region8: #{mlp1b_forward.2} parent=0 // loop_exit
    _

</llo_original>
